<compile_context>
chip_gen: v6e
topology: v6e:2x2x1
jax: 0.10.0
libtpu: 0.0.40
codegen_flags: <defaults>
</compile_context>

<pallas_src>
import jax
import jax.numpy as jnp
from jax.experimental import pallas as pl
from jax.experimental.pallas import tpu as pltpu


def _round_up(x, m):
    return (x + m - 1) // m * m


def _predictor_kernel(bill_ref, leg_ref, o_ref):
    # bill_ref, leg_ref: (TB, D) tiles of the two embedding tables (VMEM).
    # o_ref:             (TB, 1) per-row dot-product scores.
    a = bill_ref[...].astype(jnp.float32)          # upcast (free for f32; needed for bf16 on v5e)
    b = leg_ref[...].astype(jnp.float32)
    prod = a * b                                   # VPU
    o_ref[...] = jnp.sum(prod, axis=-1, keepdims=True).astype(o_ref.dtype)  # XLU reduce


def _choose_batch_tile(B, D, itemsize, *, step_budget_bytes, min_step_bytes, target_steps):
    """Batch tile TB: multiple of 8 (sublane constraint) or ==B when B<8."""
    if B < 8:
        return B
    bytes_per_row = 2 * D * itemsize                       # one row of each table
    # (a) VMEM budget: 2 inputs x 2 pipeline buffers x (TB*D*itemsize) per step.
    tb_budget = max(8, (step_budget_bytes // bytes_per_row) // 8 * 8)
    # (b) keep >= target_steps grid steps so v7x's two TensorCores both get work
    #     and DMA/compute overlap survives ...
    tb_parallel = _round_up(pl.cdiv(B, target_steps), 8)
    # (c) ... but never shrink a step below min_step_bytes of HBM traffic
    #     (per-step overhead ~0.35 us would otherwise dominate).
    tb_floor = _round_up(pl.cdiv(min_step_bytes, bytes_per_row), 8)
    tb = min(tb_budget, max(tb_parallel, tb_floor))
    tb = min(tb, (B // 8) * 8)                             # block never larger than the array
    return max(tb, 8)


def predictor_forward(bill_embeddings, legislator_embeddings, *,
                      step_budget_bytes=6 << 20,   # input bytes moved per grid step
                      min_step_bytes=1 << 20,
                      target_steps=8):
    """Pallas implementation of Predictor.forward.

    bill_embeddings:       (B, D)
    legislator_embeddings: (B, D)
    returns:               (B,)  -- (bill * legislator).sum(axis=1)
    """
    assert bill_embeddings.shape == legislator_embeddings.shape
    B, D = bill_embeddings.shape
    out_dtype = jnp.promote_types(bill_embeddings.dtype, legislator_embeddings.dtype)
    itemsize = max(jnp.dtype(bill_embeddings.dtype).itemsize,
                   jnp.dtype(legislator_embeddings.dtype).itemsize)

    TB = _choose_batch_tile(B, D, itemsize,
                            step_budget_bytes=step_budget_bytes,
                            min_step_bytes=min_step_bytes,
                            target_steps=target_steps)
    grid = (pl.cdiv(B, TB),)   # ragged last block; no padded HBM copies

    # 2 inputs x 2 buffers of (TB, D) + double-buffered (TB, 1) output + slack.
    vmem_need = 4 * TB * D * itemsize + 2 * TB * jnp.dtype(out_dtype).itemsize
    vmem_limit = int(min(max(vmem_need + (4 << 20), 32 << 20), 48 << 20))  # fits v7x 64 MiB physical

    out = pl.pallas_call(
        _predictor_kernel,
        out_shape=jax.ShapeDtypeStruct((B, 1), out_dtype),
        grid=grid,
        in_specs=[
            pl.BlockSpec((TB, D), lambda i: (i, 0)),
            pl.BlockSpec((TB, D), lambda i: (i, 0)),
        ],
        out_specs=pl.BlockSpec((TB, 1), lambda i: (i, 0)),
        compiler_params=pltpu.CompilerParams(
            dimension_semantics=("parallel",),   # megacore-shard the batch axis (v7x)
            vmem_limit_bytes=vmem_limit,
        ),
    )(bill_embeddings, legislator_embeddings)

    return out[:, 0]   # (B,), matching the torch module's return shape


if __name__ == "__main__":
    key = jax.random.PRNGKey(0)
    k = jax.random.split(key, 6)

    # 1) Small shapes consistent with the module: a batch of embedding pairs.
    B, D = 8, 16
    bill = jax.random.normal(k[0], (B, D), dtype=jnp.float32)
    leg = jax.random.normal(k[1], (B, D), dtype=jnp.float32)
    scores = predictor_forward(bill, leg)
    jax.block_until_ready(scores)
    ref = jnp.sum(bill * leg, axis=1)
    assert scores.shape == (B,)
    assert jnp.allclose(scores, ref, atol=1e-5, rtol=1e-5)

    # 2) Ragged batch (B not a multiple of the tile) + multi-step grid:
    #    exercises the masked last block with NO wrapper-side padding.
    B2, D2 = 41, 256
    bill2 = jax.random.normal(k[2], (B2, D2), dtype=jnp.float32)
    leg2 = jax.random.normal(k[3], (B2, D2), dtype=jnp.float32)
    scores2 = predictor_forward(bill2, leg2, min_step_bytes=1 << 14)  # force >1 grid step
    jax.block_until_ready(scores2)
    ref2 = jnp.sum(bill2 * leg2, axis=1)
    assert scores2.shape == (B2,)
    assert jnp.allclose(scores2, ref2, atol=1e-4, rtol=1e-4)

    # 3) bf16 storage (the ~2x HBM-traffic lever), f32 accumulation in-kernel.
    B3, D3 = 33, 128
    bill3 = jax.random.normal(k[4], (B3, D3), dtype=jnp.bfloat16)
    leg3 = jax.random.normal(k[5], (B3, D3), dtype=jnp.bfloat16)
    scores3 = predictor_forward(bill3, leg3)
    jax.block_until_ready(scores3)
    ref3 = jnp.sum(bill3.astype(jnp.float32) * leg3.astype(jnp.float32), axis=1).astype(jnp.bfloat16)
    assert scores3.shape == (B3,)
    assert scores3.dtype == jnp.bfloat16
    assert jnp.allclose(scores3.astype(jnp.float32), ref3.astype(jnp.float32), atol=1e-1, rtol=2e-2)

    print("KERNEL_OK")
</pallas_src>

<mosaic_0001>
module attributes {stable_mosaic.version = 11 : i64} {
  func.func @_predictor_kernel(%arg0: i32, %arg1: memref<8x16xf32, #tpu.memory_space<vmem>>, %arg2: memref<8x16xf32, #tpu.memory_space<vmem>>, %arg3: memref<8x1xf32, #tpu.memory_space<vmem>>) attributes {dimension_semantics = [#tpu.dimension_semantics<parallel>], iteration_bounds = array<i64: 1>, scalar_prefetch = 0 : i64, scratch_operands = 0 : i64, tpu.core_type = #tpu.core_type<tc>, window_params = [{transform_indices = @transform_0, window_bounds = array<i64: 8, 16>}, {transform_indices = @transform_1, window_bounds = array<i64: 8, 16>}, {transform_indices = @transform_2, window_bounds = array<i64: 8, 1>}]} {
    %c0 = arith.constant 0 : index
    %c0_0 = arith.constant 0 : index
    %0 = vector.load %arg1[%c0, %c0_0] : memref<8x16xf32, #tpu.memory_space<vmem>>, vector<8x16xf32>
    %c0_1 = arith.constant 0 : index
    %c0_2 = arith.constant 0 : index
    %1 = vector.load %arg2[%c0_1, %c0_2] : memref<8x16xf32, #tpu.memory_space<vmem>>, vector<8x16xf32>
    %2 = arith.mulf %0, %1 : vector<8x16xf32>
    %cst = arith.constant dense<0.000000e+00> : vector<8xf32>
    %3 = vector.multi_reduction <add>, %2, %cst [1] : vector<8x16xf32> to vector<8xf32>
    %4 = vector.shape_cast %3 : vector<8xf32> to vector<8x1xf32>
    %c0_3 = arith.constant 0 : index
    %c0_4 = arith.constant 0 : index
    %5 = vector.load %arg3[%c0_3, %c0_4] : memref<8x1xf32, #tpu.memory_space<vmem>>, vector<8x1xf32>
    tpu.vector_store %arg3[%c0_3, %c0_4], %4 {strides = array<i32>} : memref<8x1xf32, #tpu.memory_space<vmem>>, vector<8x1xf32>,
    return
  }
  func.func @transform_0(%arg0: i32) -> (i32, i32) {
    %c0_i32 = arith.constant 0 : i32
    %c0_i32_0 = arith.constant 0 : i32
    return %arg0, %c0_i32 : i32, i32
  }
  func.func @transform_1(%arg0: i32) -> (i32, i32) {
    %c0_i32 = arith.constant 0 : i32
    %c0_i32_0 = arith.constant 0 : i32
    return %arg0, %c0_i32 : i32, i32
  }
  func.func @transform_2(%arg0: i32) -> (i32, i32) {
    %c0_i32 = arith.constant 0 : i32
    %c0_i32_0 = arith.constant 0 : i32
    return %arg0, %c0_i32 : i32, i32
  }
}

</mosaic_0001>

<llo_original>
// kernel: tpu_custom_call.1
$region0: #{tpu_custom_call.1}
  #allocation0 [shape = 'u32[]', space=smem, size = 0x4, offset = 0x4, fixed_abs, tag = 'smem constant byte address 0x4 - core index']
  #allocation1 [shape = 'u32[144,128]{1,0:T(1,128)}', space=vmem, size = 0x12000, scoped, tag = 'internal scratch']
  %s0 = inlined_call_operand.hbm [shape: f32[8,16], index: 0, kind: input, shape index: {}]
  %s1 = inlined_call_operand.hbm [shape: f32[8,16], index: 1, kind: input, shape index: {}]
  %s2 = inlined_call_operand.vmem [shape: f32[8,1], index: 2, kind: output, shape index: {}]
  %s3 = sld [smem:[#allocation0]]
  $region26: #{tpu_custom_call.1} parent=0
    _
  %s5 = ssub.s32 1, %s3
  %s6 = scalar_select 0, %s5, %s3
  $region1: #{tpu_custom_call.1} parent=0
    #allocation2 [shape = 'u8[4096]{0}', space=vmem, size = 0x1000, scoped, tag = 'input window, operand 0, single buffered']
    #allocation3 [shape = 's32[1]{0}', space=sflag, size = 0x4, scoped, tag = 'scoped memory for tpu_custom_call.1']
    #allocation4 [shape = 'u8[4096]{0}', space=vmem, size = 0x1000, scoped, tag = 'input window, operand 1, single buffered']
    #allocation5 [shape = 's32[1]{0}', space=sflag, size = 0x4, scoped, tag = 'scoped memory for tpu_custom_call.1']
    %7 = vsyncpa [#allocation3], 0
    %8 = vsyncpa [#allocation5], 0
    // Predicated region
    $region2: #{tpu_custom_call.1} parent=1 // pred_check
      _
    $region3: #{tpu_custom_call.1} parent=1 // pred_check_branch
      %10 = sbr.rel (0) target = $region5
    $region4: #{tpu_custom_call.1} parent=1 // pred_region
      %s12 = ssub.s32 128, 128
      %13 = vsyncadd [#allocation3], %s12
      %s15 = sshll.u32 [#allocation2], 4
      %s16 = int_to_ptr.vmem [resolvable:$true] %s15
      %18 = dma.hbm_to_vmem [thread:$0]  %s0, 128, %s16, [#allocation3]
    $region5: #{tpu_custom_call.1} parent=1 // pred_fallthru
      _
    // Predicated region
    $region6: #{tpu_custom_call.1} parent=1 // pred_check
      _
    $region7: #{tpu_custom_call.1} parent=1 // pred_check_branch
      %20 = sbr.rel (0) target = $region9
    $region8: #{tpu_custom_call.1} parent=1 // pred_region
      %s22 = ssub.s32 128, 128
      %23 = vsyncadd [#allocation5], %s22
      %s25 = sshll.u32 [#allocation4], 4
      %s26 = int_to_ptr.vmem [resolvable:$true] %s25
      %28 = dma.hbm_to_vmem [thread:$0]  %s1, 128, %s26, [#allocation5]
    $region9: #{tpu_custom_call.1} parent=1 // pred_fallthru
      _
    // Predicated region
    $region10: #{tpu_custom_call.1} parent=1 // pred_check
      _
    $region11: #{tpu_custom_call.1} parent=1 // pred_check_branch
      %30 = sbr.rel (0) target = $region13
    $region12: #{tpu_custom_call.1} parent=1 // pred_region
      %31 = dma.done [#allocation3], 128
    $region13: #{tpu_custom_call.1} parent=1 // pred_fallthru
      _
    // Predicated region
    $region14: #{tpu_custom_call.1} parent=1 // pred_check
      _
    $region15: #{tpu_custom_call.1} parent=1 // pred_check_branch
      %33 = sbr.rel (0) target = $region17
    $region16: #{tpu_custom_call.1} parent=1 // pred_region
      %34 = dma.done [#allocation5], 128
    $region17: #{tpu_custom_call.1} parent=1 // pred_fallthru
      _
    %v35 = vld [vmem:[#allocation2] sm:$0xff]
    %v36 = vld [vmem:[#allocation4] sm:$0xff]
    %v37 = vmul.f32 %v35, %v36
    %vm38 = vcmask 130048
    %v39 = vsel %vm38, %v37, 0.0
    %40 = vadd.xlane.f32.xlu0 %v39
    %v41 = vpop.xlane.xlu0 %40
    %vm42 = vcmask 7168
    %43 = vst.msk [vmem:[%s2] sm:$0xff] %vm42, %v41
    // Predicated region
    $region18: #{tpu_custom_call.1} parent=1 // pred_check
      _
    $region19: #{tpu_custom_call.1} parent=1 // pred_check_branch
      %45 = sbr.rel (0) target = $region21
    $region20: #{tpu_custom_call.1} parent=1 // pred_region
      _
    $region21: #{tpu_custom_call.1} parent=1 // pred_fallthru
      _
    // Predicated region
    $region22: #{tpu_custom_call.1} parent=1 // pred_check
      _
    $region23: #{tpu_custom_call.1} parent=1 // pred_check_branch
      %47 = sbr.rel (0) target = $region25
    $region24: #{tpu_custom_call.1} parent=1 // pred_region
      _
    $region25: #{tpu_custom_call.1} parent=1 // pred_fallthru
      _
    %48 = vsyncpa [#allocation3], 1
    %49 = vsyncpa [#allocation5], 1

</llo_original>
